<compile_context>
chip_gen: v7x
topology: tpu7x:2x2x1
jax: 0.10.0
libtpu: 0.0.40
codegen_flags: <defaults>
</compile_context>

<pallas_src>
import jax
import jax.numpy as jnp
from jax import lax
from jax.experimental import pallas as pl
from jax.experimental.pallas import tpu as pltpu

TRIPLET_MARGIN = 0.5     # module default
COS_EPS = 1e-8           # F.cosine_similarity eps


def _make_kernel(tb, g, o, y):
    """Kernel over one (TB, ., .) batch block. Candidate rows: [0,g)=gold,
    [g,g+o)=oracle, [g+o,y)=negative."""
    go = g + o

    def kernel(anchor_ref, cand_ref, out_ref):
        # anchor_ref: (TB, A, D) bf16, cand_ref: (TB, Y, D) bf16,
        # out_ref: (TB, 3, A) f32 with rows [loss, d_neg, d_pos1].
        row = lax.broadcasted_iota(jnp.int32, (y, 1), 0)        # candidate row ids
        for b in range(tb):                                     # TB static -> unrolled
            x = anchor_ref[b]                                   # (A, D) bf16
            c = cand_ref[b]                                     # (Y, D) bf16
            # One MXU matmul per batch element; contract the lane-dense hidden
            # axis of both operands (no explicit transpose materialized).
            w12 = lax.dot_general(c, x, (((1,), (1,)), ((), ())),
                                  preferred_element_type=jnp.float32)  # (Y, A)
            xf = x.astype(jnp.float32)
            cf = c.astype(jnp.float32)
            na = jnp.sum(xf * xf, axis=-1)                      # (A,)  lane reduce
            nc = jnp.sum(cf * cf, axis=-1, keepdims=True)       # (Y, 1)
            denom2 = jnp.maximum(nc * na[None, :], COS_EPS * COS_EPS)  # (Y, A)
            dist = 1.0 - w12 * lax.rsqrt(denom2)                # cosine distance
            # Per-segment min over the candidate (sublane) axis -> (1, A) each.
            d_pos1 = jnp.min(jnp.where(row < g, dist, jnp.inf),
                             axis=0, keepdims=True)
            d_pos2 = jnp.min(jnp.where((row >= g) & (row < go), dist, jnp.inf),
                             axis=0, keepdims=True)
            d_neg = jnp.min(jnp.where(row >= go, dist, jnp.inf),
                            axis=0, keepdims=True)
            loss = jnp.maximum((d_pos1 + d_pos2) * 0.5 - d_neg + TRIPLET_MARGIN, 0.0)
            # Single merged (3, A) writeback slab for this batch element.
            out_ref[b] = jnp.concatenate([loss, d_neg, d_pos1], axis=0)

    return kernel


def _pick_block_b(B, max_tb=8):
    """Batch block size: large enough to amortize per-grid-step overhead, small
    enough that the grid keeps >= 2 steps (v7x megacore sharding) and blocks stay
    tiny relative to the scoped VMEM limit (v7x has only 64 MiB physical)."""
    if B <= 1:
        return 1
    return max(1, min(max_tb, B // 2))


@jax.jit
def triplet_loss(rep_anchor, rep_negative, rep_pos_oracle, rep_pos_gold):
    """Returns (losses, distance_neg, distance_pos_1), each of shape (B, A), f32."""
    B, A, D = rep_anchor.shape
    G = rep_pos_gold.shape[1]
    O = rep_pos_oracle.shape[1]
    N = rep_negative.shape[1]
    Y = G + O + N

    # bf16 operands for the MXU (native on all generations) + half the HBM/DMA
    # bytes; the f32 epilogue lives inside the kernel.
    anchor = rep_anchor.astype(jnp.bfloat16)                              # (B, A, D)
    cand = jnp.concatenate([rep_pos_gold, rep_pos_oracle, rep_negative],
                           axis=1).astype(jnp.bfloat16)                   # (B, Y, D)

    TB = _pick_block_b(B)
    Bp = ((B + TB - 1) // TB) * TB
    if Bp != B:
        # Pad batch so the grid is exact; padded rows produce finite garbage
        # (dist == 1 everywhere) and are dropped below.
        pad = ((0, Bp - B), (0, 0), (0, 0))
        anchor = jnp.pad(anchor, pad)
        cand = jnp.pad(cand, pad)

    out = pl.pallas_call(
        _make_kernel(TB, G, O, Y),
        out_shape=jax.ShapeDtypeStruct((Bp, 3, A), jnp.float32),
        grid_spec=pltpu.PrefetchScalarGridSpec(
            num_scalar_prefetch=0,
            grid=(Bp // TB,),
            in_specs=[
                pl.BlockSpec((TB, A, D), lambda i: (i, 0, 0)),
                pl.BlockSpec((TB, Y, D), lambda i: (i, 0, 0)),
            ],
            out_specs=pl.BlockSpec((TB, 3, A), lambda i: (i, 0, 0)),
        ),
        compiler_params=pltpu.CompilerParams(
            # Batch blocks are independent -> shard grid across TCs on v7x;
            # measured no-op on single-TC v5e/v6e.
            dimension_semantics=("parallel",),
        ),
    )(anchor, cand)

    out = out[:B]
    return out[:, 0, :], out[:, 1, :], out[:, 2, :]


def triplet_loss_ref(rep_anchor, rep_negative, rep_pos_oracle, rep_pos_gold):
    """Pure-JAX f32 reference mirroring the PyTorch forward (gold+oracle branch)."""
    def min_cos_dist(x, y):
        w12 = jnp.einsum("bad,byd->bay", x, y)
        w1 = jnp.sum(x * x, axis=-1)
        w2 = jnp.sum(y * y, axis=-1)
        denom2 = jnp.maximum(w1[:, :, None] * w2[:, None, :], COS_EPS * COS_EPS)
        return jnp.min(1.0 - w12 * lax.rsqrt(denom2), axis=2)

    d_pos1 = min_cos_dist(rep_anchor, rep_pos_gold)
    d_pos2 = min_cos_dist(rep_anchor, rep_pos_oracle)
    d_neg = min_cos_dist(rep_anchor, rep_negative)
    losses = jnp.maximum((d_pos1 + d_pos2) * 0.5 - d_neg + TRIPLET_MARGIN, 0.0)
    return losses, d_neg, d_pos1


if __name__ == "__main__":
    key = jax.random.PRNGKey(0)
    ka, kg, ko, kn = jax.random.split(key, 4)

    # Small sentence-embedding shaped inputs: batch=4 (-> 2 grid steps with TB=2),
    # 8 anchor sentences, 6 gold / 5 oracle / 7 negative candidates, hidden=128.
    B, A, G, O, N, D = 4, 8, 6, 5, 7, 128
    rep_anchor = jax.random.normal(ka, (B, A, D), jnp.float32)
    rep_pos_gold = jax.random.normal(kg, (B, G, D), jnp.float32)
    rep_pos_oracle = jax.random.normal(ko, (B, O, D), jnp.float32)
    rep_negative = jax.random.normal(kn, (B, N, D), jnp.float32)

    out = triplet_loss(rep_anchor, rep_negative, rep_pos_oracle, rep_pos_gold)
    out = jax.block_until_ready(out)

    ref = triplet_loss_ref(rep_anchor, rep_negative, rep_pos_oracle, rep_pos_gold)
    names = ("losses", "distance_neg", "distance_pos_1")
    for name, got, want in zip(names, out, ref):
        assert got.shape == want.shape, (name, got.shape, want.shape)
        assert bool(jnp.all(jnp.isfinite(got))), name
        # bf16 MXU operands vs f32 reference -> loose-but-meaningful tolerances.
        assert jnp.allclose(got, want, rtol=2e-2, atol=5e-3), (
            name, float(jnp.max(jnp.abs(got - want))))

    print("KERNEL_OK")
</pallas_src>

<mosaic_0001>
module attributes {stable_mosaic.version = 11 : i64} {
  func.func @kernel(%arg0: i32, %arg1: memref<2x8x128xbf16, #tpu.memory_space<vmem>>, %arg2: memref<2x18x128xbf16, #tpu.memory_space<vmem>>, %arg3: memref<2x3x8xf32, #tpu.memory_space<vmem>>) attributes {dimension_semantics = [#tpu.dimension_semantics<parallel>], iteration_bounds = array<i64: 2>, scalar_prefetch = 0 : i64, scratch_operands = 0 : i64, tpu.core_type = #tpu.core_type<tc>, window_params = [{transform_indices = @transform_0, window_bounds = array<i64: 2, 8, 128>}, {transform_indices = @transform_1, window_bounds = array<i64: 2, 18, 128>}, {transform_indices = @transform_2, window_bounds = array<i64: 2, 3, 8>}]} {
    %0 = tpu.iota {dimensions = array<i32: 0>} : vector<18x1xi32>
    %c0 = arith.constant 0 : index
    %c0_0 = arith.constant 0 : index
    %c0_1 = arith.constant 0 : index
    %1 = vector.load %arg1[%c0, %c0_0, %c0_1] : memref<2x8x128xbf16, #tpu.memory_space<vmem>>, vector<1x8x128xbf16>
    %2 = vector.shape_cast %1 : vector<1x8x128xbf16> to vector<8x128xbf16>
    %c0_2 = arith.constant 0 : index
    %c0_3 = arith.constant 0 : index
    %c0_4 = arith.constant 0 : index
    %3 = vector.load %arg2[%c0_2, %c0_3, %c0_4] : memref<2x18x128xbf16, #tpu.memory_space<vmem>>, vector<1x18x128xbf16>
    %4 = vector.shape_cast %3 : vector<1x18x128xbf16> to vector<18x128xbf16>
    %cst = arith.constant dense<0.000000e+00> : vector<18x8xf32>
    %5 = tpu.matmul %4, %2, %cst {dimension_numbers = #tpu.dot_dimension_numbers<[1], [1], [0], [0], [0, 0, 1, 0], [], []>} : vector<18x128xbf16>, vector<8x128xbf16>, vector<18x8xf32> -> vector<18x8xf32>
    %6 = arith.extf %2 : vector<8x128xbf16> to vector<8x128xf32>
    %7 = arith.extf %4 : vector<18x128xbf16> to vector<18x128xf32>
    %8 = arith.mulf %6, %6 : vector<8x128xf32>
    %cst_5 = arith.constant dense<0.000000e+00> : vector<8xf32>
    %9 = vector.multi_reduction <add>, %8, %cst_5 [1] : vector<8x128xf32> to vector<8xf32>
    %10 = arith.mulf %7, %7 : vector<18x128xf32>
    %cst_6 = arith.constant dense<0.000000e+00> : vector<18xf32>
    %11 = vector.multi_reduction <add>, %10, %cst_6 [1] : vector<18x128xf32> to vector<18xf32>
    %12 = vector.shape_cast %11 : vector<18xf32> to vector<18x1xf32>
    %13 = vector.shape_cast %9 : vector<8xf32> to vector<1x8xf32>
    %14 = vector.broadcast %12 : vector<18x1xf32> to vector<18x8xf32>
    %15 = vector.broadcast %13 : vector<1x8xf32> to vector<18x8xf32>
    %16 = arith.mulf %14, %15 : vector<18x8xf32>
    %cst_7 = arith.constant 1.000000e-16 : f32
    %17 = vector.broadcast %cst_7 : f32 to vector<18x8xf32>
    %18 = arith.maximumf %16, %17 : vector<18x8xf32>
    %19 = math.rsqrt %18 : vector<18x8xf32>
    %20 = arith.mulf %5, %19 : vector<18x8xf32>
    %cst_8 = arith.constant 1.000000e+00 : f32
    %21 = vector.broadcast %cst_8 : f32 to vector<18x8xf32>
    %22 = arith.subf %21, %20 : vector<18x8xf32>
    %c6_i32 = arith.constant 6 : i32
    %23 = vector.broadcast %c6_i32 : i32 to vector<18x1xi32>
    %24 = arith.cmpi slt, %0, %23 : vector<18x1xi32>
    %cst_9 = arith.constant 0x7F800000 : f32
    %25 = vector.shape_cast %24 : vector<18x1xi1> to vector<18x1xi1>
    %26 = vector.broadcast %25 : vector<18x1xi1> to vector<18x8xi1>
    %27 = vector.broadcast %cst_9 : f32 to vector<18x8xf32>
    %28 = arith.select %26, %22, %27 : vector<18x8xi1>, vector<18x8xf32>
    %cst_10 = arith.constant dense<0x7F800000> : vector<8xf32>
    %29 = vector.multi_reduction <minimumf>, %28, %cst_10 [0] : vector<18x8xf32> to vector<8xf32>
    %30 = vector.shape_cast %29 : vector<8xf32> to vector<1x8xf32>
    %c6_i32_11 = arith.constant 6 : i32
    %31 = vector.broadcast %c6_i32_11 : i32 to vector<18x1xi32>
    %32 = arith.cmpi sge, %0, %31 : vector<18x1xi32>
    %c11_i32 = arith.constant 11 : i32
    %33 = vector.broadcast %c11_i32 : i32 to vector<18x1xi32>
    %34 = arith.cmpi slt, %0, %33 : vector<18x1xi32>
    %35 = arith.andi %32, %34 : vector<18x1xi1>
    %cst_12 = arith.constant 0x7F800000 : f32
    %36 = vector.shape_cast %35 : vector<18x1xi1> to vector<18x1xi1>
    %37 = vector.broadcast %36 : vector<18x1xi1> to vector<18x8xi1>
    %38 = vector.broadcast %cst_12 : f32 to vector<18x8xf32>
    %39 = arith.select %37, %22, %38 : vector<18x8xi1>, vector<18x8xf32>
    %cst_13 = arith.constant dense<0x7F800000> : vector<8xf32>
    %40 = vector.multi_reduction <minimumf>, %39, %cst_13 [0] : vector<18x8xf32> to vector<8xf32>
    %41 = vector.shape_cast %40 : vector<8xf32> to vector<1x8xf32>
    %c11_i32_14 = arith.constant 11 : i32
    %42 = vector.broadcast %c11_i32_14 : i32 to vector<18x1xi32>
    %43 = arith.cmpi sge, %0, %42 : vector<18x1xi32>
    %cst_15 = arith.constant 0x7F800000 : f32
    %44 = vector.shape_cast %43 : vector<18x1xi1> to vector<18x1xi1>
    %45 = vector.broadcast %44 : vector<18x1xi1> to vector<18x8xi1>
    %46 = vector.broadcast %cst_15 : f32 to vector<18x8xf32>
    %47 = arith.select %45, %22, %46 : vector<18x8xi1>, vector<18x8xf32>
    %cst_16 = arith.constant dense<0x7F800000> : vector<8xf32>
    %48 = vector.multi_reduction <minimumf>, %47, %cst_16 [0] : vector<18x8xf32> to vector<8xf32>
    %49 = vector.shape_cast %48 : vector<8xf32> to vector<1x8xf32>
    %50 = arith.addf %30, %41 : vector<1x8xf32>
    %cst_17 = arith.constant 5.000000e-01 : f32
    %51 = vector.broadcast %cst_17 : f32 to vector<1x8xf32>
    %52 = arith.mulf %50, %51 : vector<1x8xf32>
    %53 = arith.subf %52, %49 : vector<1x8xf32>
    %cst_18 = arith.constant 5.000000e-01 : f32
    %54 = vector.broadcast %cst_18 : f32 to vector<1x8xf32>
    %55 = arith.addf %53, %54 : vector<1x8xf32>
    %cst_19 = arith.constant 0.000000e+00 : f32
    %56 = vector.broadcast %cst_19 : f32 to vector<1x8xf32>
    %57 = arith.maximumf %55, %56 : vector<1x8xf32>
    %58 = tpu.concatenate %57, %49, %30 in 0 : vector<1x8xf32>, vector<1x8xf32>, vector<1x8xf32> -> vector<3x8xf32>
    %c0_20 = arith.constant 0 : index
    %c0_21 = arith.constant 0 : index
    %c0_22 = arith.constant 0 : index
    %59 = vector.load %arg3[%c0_20, %c0_21, %c0_22] : memref<2x3x8xf32, #tpu.memory_space<vmem>>, vector<1x3x8xf32>
    %60 = vector.shape_cast %59 : vector<1x3x8xf32> to vector<3x8xf32>
    %61 = vector.shape_cast %58 : vector<3x8xf32> to vector<1x3x8xf32>
    tpu.vector_store %arg3[%c0_20, %c0_21, %c0_22], %61 {strides = array<i32>} : memref<2x3x8xf32, #tpu.memory_space<vmem>>, vector<1x3x8xf32>,
    %c1 = arith.constant 1 : index
    %c0_23 = arith.constant 0 : index
    %c0_24 = arith.constant 0 : index
    %62 = vector.load %arg1[%c1, %c0_23, %c0_24] : memref<2x8x128xbf16, #tpu.memory_space<vmem>>, vector<1x8x128xbf16>
    %63 = vector.shape_cast %62 : vector<1x8x128xbf16> to vector<8x128xbf16>
    %c1_25 = arith.constant 1 : index
    %c0_26 = arith.constant 0 : index
    %c0_27 = arith.constant 0 : index
    %64 = vector.load %arg2[%c1_25, %c0_26, %c0_27] : memref<2x18x128xbf16, #tpu.memory_space<vmem>>, vector<1x18x128xbf16>
    %65 = vector.shape_cast %64 : vector<1x18x128xbf16> to vector<18x128xbf16>
    %cst_28 = arith.constant dense<0.000000e+00> : vector<18x8xf32>
    %66 = tpu.matmul %65, %63, %cst_28 {dimension_numbers = #tpu.dot_dimension_numbers<[1], [1], [0], [0], [0, 0, 1, 0], [], []>} : vector<18x128xbf16>, vector<8x128xbf16>, vector<18x8xf32> -> vector<18x8xf32>
    %67 = arith.extf %63 : vector<8x128xbf16> to vector<8x128xf32>
    %68 = arith.extf %65 : vector<18x128xbf16> to vector<18x128xf32>
    %69 = arith.mulf %67, %67 : vector<8x128xf32>
    %cst_29 = arith.constant dense<0.000000e+00> : vector<8xf32>
    %70 = vector.multi_reduction <add>, %69, %cst_29 [1] : vector<8x128xf32> to vector<8xf32>
    %71 = arith.mulf %68, %68 : vector<18x128xf32>
    %cst_30 = arith.constant dense<0.000000e+00> : vector<18xf32>
    %72 = vector.multi_reduction <add>, %71, %cst_30 [1] : vector<18x128xf32> to vector<18xf32>
    %73 = vector.shape_cast %72 : vector<18xf32> to vector<18x1xf32>
    %74 = vector.shape_cast %70 : vector<8xf32> to vector<1x8xf32>
    %75 = vector.broadcast %73 : vector<18x1xf32> to vector<18x8xf32>
    %76 = vector.broadcast %74 : vector<1x8xf32> to vector<18x8xf32>
    %77 = arith.mulf %75, %76 : vector<18x8xf32>
    %cst_31 = arith.constant 1.000000e-16 : f32
    %78 = vector.broadcast %cst_31 : f32 to vector<18x8xf32>
    %79 = arith.maximumf %77, %78 : vector<18x8xf32>
    %80 = math.rsqrt %79 : vector<18x8xf32>
    %81 = arith.mulf %66, %80 : vector<18x8xf32>
    %cst_32 = arith.constant 1.000000e+00 : f32
    %82 = vector.broadcast %cst_32 : f32 to vector<18x8xf32>
    %83 = arith.subf %82, %81 : vector<18x8xf32>
    %c6_i32_33 = arith.constant 6 : i32
    %84 = vector.broadcast %c6_i32_33 : i32 to vector<18x1xi32>
    %85 = arith.cmpi slt, %0, %84 : vector<18x1xi32>
    %cst_34 = arith.constant 0x7F800000 : f32
    %86 = vector.shape_cast %85 : vector<18x1xi1> to vector<18x1xi1>
    %87 = vector.broadcast %86 : vector<18x1xi1> to vector<18x8xi1>
    %88 = vector.broadcast %cst_34 : f32 to vector<18x8xf32>
    %89 = arith.select %87, %83, %88 : vector<18x8xi1>, vector<18x8xf32>
    %cst_35 = arith.constant dense<0x7F800000> : vector<8xf32>
    %90 = vector.multi_reduction <minimumf>, %89, %cst_35 [0] : vector<18x8xf32> to vector<8xf32>
    %91 = vector.shape_cast %90 : vector<8xf32> to vector<1x8xf32>
    %c6_i32_36 = arith.constant 6 : i32
    %92 = vector.broadcast %c6_i32_36 : i32 to vector<18x1xi32>
    %93 = arith.cmpi sge, %0, %92 : vector<18x1xi32>
    %c11_i32_37 = arith.constant 11 : i32
    %94 = vector.broadcast %c11_i32_37 : i32 to vector<18x1xi32>
    %95 = arith.cmpi slt, %0, %94 : vector<18x1xi32>
    %96 = arith.andi %93, %95 : vector<18x1xi1>
    %cst_38 = arith.constant 0x7F800000 : f32
    %97 = vector.shape_cast %96 : vector<18x1xi1> to vector<18x1xi1>
    %98 = vector.broadcast %97 : vector<18x1xi1> to vector<18x8xi1>
    %99 = vector.broadcast %cst_38 : f32 to vector<18x8xf32>
    %100 = arith.select %98, %83, %99 : vector<18x8xi1>, vector<18x8xf32>
    %cst_39 = arith.constant dense<0x7F800000> : vector<8xf32>
    %101 = vector.multi_reduction <minimumf>, %100, %cst_39 [0] : vector<18x8xf32> to vector<8xf32>
    %102 = vector.shape_cast %101 : vector<8xf32> to vector<1x8xf32>
    %c11_i32_40 = arith.constant 11 : i32
    %103 = vector.broadcast %c11_i32_40 : i32 to vector<18x1xi32>
    %104 = arith.cmpi sge, %0, %103 : vector<18x1xi32>
    %cst_41 = arith.constant 0x7F800000 : f32
    %105 = vector.shape_cast %104 : vector<18x1xi1> to vector<18x1xi1>
    %106 = vector.broadcast %105 : vector<18x1xi1> to vector<18x8xi1>
    %107 = vector.broadcast %cst_41 : f32 to vector<18x8xf32>
    %108 = arith.select %106, %83, %107 : vector<18x8xi1>, vector<18x8xf32>
    %cst_42 = arith.constant dense<0x7F800000> : vector<8xf32>
    %109 = vector.multi_reduction <minimumf>, %108, %cst_42 [0] : vector<18x8xf32> to vector<8xf32>
    %110 = vector.shape_cast %109 : vector<8xf32> to vector<1x8xf32>
    %111 = arith.addf %91, %102 : vector<1x8xf32>
    %cst_43 = arith.constant 5.000000e-01 : f32
    %112 = vector.broadcast %cst_43 : f32 to vector<1x8xf32>
    %113 = arith.mulf %111, %112 : vector<1x8xf32>
    %114 = arith.subf %113, %110 : vector<1x8xf32>
    %cst_44 = arith.constant 5.000000e-01 : f32
    %115 = vector.broadcast %cst_44 : f32 to vector<1x8xf32>
    %116 = arith.addf %114, %115 : vector<1x8xf32>
    %cst_45 = arith.constant 0.000000e+00 : f32
    %117 = vector.broadcast %cst_45 : f32 to vector<1x8xf32>
    %118 = arith.maximumf %116, %117 : vector<1x8xf32>
    %119 = tpu.concatenate %118, %110, %91 in 0 : vector<1x8xf32>, vector<1x8xf32>, vector<1x8xf32> -> vector<3x8xf32>
    %c1_46 = arith.constant 1 : index
    %c0_47 = arith.constant 0 : index
    %c0_48 = arith.constant 0 : index
    %120 = vector.load %arg3[%c1_46, %c0_47, %c0_48] : memref<2x3x8xf32, #tpu.memory_space<vmem>>, vector<1x3x8xf32>
    %121 = vector.shape_cast %120 : vector<1x3x8xf32> to vector<3x8xf32>
    %122 = vector.shape_cast %119 : vector<3x8xf32> to vector<1x3x8xf32>
    tpu.vector_store %arg3[%c1_46, %c0_47, %c0_48], %122 {strides = array<i32>} : memref<2x3x8xf32, #tpu.memory_space<vmem>>, vector<1x3x8xf32>,
    return
  }
  func.func @transform_0(%arg0: i32) -> (i32, i32, i32) {
    %c0_i32 = arith.constant 0 : i32
    %c0_i32_0 = arith.constant 0 : i32
    %c0_i32_1 = arith.constant 0 : i32
    return %arg0, %c0_i32, %c0_i32_0 : i32, i32, i32
  }
  func.func @transform_1(%arg0: i32) -> (i32, i32, i32) {
    %c0_i32 = arith.constant 0 : i32
    %c0_i32_0 = arith.constant 0 : i32
    %c0_i32_1 = arith.constant 0 : i32
    return %arg0, %c0_i32, %c0_i32_0 : i32, i32, i32
  }
  func.func @transform_2(%arg0: i32) -> (i32, i32, i32) {
    %c0_i32 = arith.constant 0 : i32
    %c0_i32_0 = arith.constant 0 : i32
    %c0_i32_1 = arith.constant 0 : i32
    return %arg0, %c0_i32, %c0_i32_0 : i32, i32, i32
  }
}

</mosaic_0001>

<llo_original>
// kernel: triplet_loss.1
$region0: #{triplet_loss.1}
  #allocation0 [shape = 'u32[]', space=smem, size = 0x4, offset = 0x4, fixed_abs, tag = 'smem constant byte address 0x4 - core index']
  #allocation1 [shape = 'u32[144,128]{1,0:T(1,128)}', space=vmem, size = 0x12000, scoped, tag = 'internal scratch']
  %s0 = inlined_call_operand.vmem [shape: bf16[4,8,128], index: 0, kind: input, shape index: {}]
  %s1 = inlined_call_operand.vmem [shape: bf16[4,18,128], index: 1, kind: input, shape index: {}]
  %s2 = inlined_call_operand.vmem [shape: f32[4,3,8], index: 2, kind: output, shape index: {}]
  %s3 = sld [smem:[#allocation0]]
  $region41: #{triplet_loss.1} parent=0
    _
  %s5 = ssub.s32 1, %s3
  %s6 = scalar_select 0, %s5, %s3
  loop: start=0, step=1, limit=4
  $region2: #{triplet_loss.1} parent=0 // loop_pre_header
    _
  $region3: #{triplet_loss.1} parent=0 // loop_header
    %s8 = sphi 0, %s12
    %p9 = scmp.ge.s32.totalorder %s8, 4
    %s18 = sphi 0, %s20
    %s21 = sphi 0, %s18
    %s22 = sphi 0, %s21
    %s38 = sphi 0, %s22
    %s44 = sphi 0, %s46
    %s47 = sphi 0, %s44
    %s48 = sphi 0, %s47
    %s64 = sphi 0, %s48
    %s70 = sphi 0, %s72
    %s73 = sphi 0, %s70
    %s74 = sphi 0, %s73
    %s90 = sphi 0, %s74
  $region4: #{triplet_loss.1} parent=0 // loop_header_branch
    %11 = sbr.rel (%p9) target = $region8
  $region5: #{triplet_loss.1} parent=0 // loop_body
    %s13 = ssub.s32 %s8, 1
    %s14 = ssub.s32 %s8, 2
    %s15 = sadd.s32 %s8, 1
    %s16 = ssub.s32 %s8, %s15
    %p17 = scmp.eq.s32.totalorder %s16, 0
    %s19 = sadd.s32 %s18, 1
    %s20 = scalar_select %p17, %s18, %s19
    %p23 = pneg %p17
    %p24 = scmp.eq.s32.totalorder %s8, 1
    %p25 = por %p23, %p24
    %p26 = scmp.ne.s32.totalorder %s18, %s21
    %p27 = scmp.eq.s32.totalorder %s8, 0
    %p28 = por %p26, %p27
    %p29 = scmp.ne.s32.totalorder %s18, %s21
    %p30 = scmp.eq.s32.totalorder %s13, 1
    %p31 = por %p29, %p30
    %p32 = scmp.ne.s32.totalorder %s21, %s22
    %p33 = scmp.eq.s32.totalorder %s13, 0
    %p34 = por %p32, %p33
    %p35 = scmp.ne.s32.totalorder %s21, %s22
    %p36 = scmp.eq.s32.totalorder %s14, 1
    %p37 = por %p35, %p36
    %p39 = scmp.ne.s32.totalorder %s22, %s38
    %p40 = scmp.eq.s32.totalorder %s14, 0
    %p41 = por %p39, %p40
    %s42 = ssub.s32 %s8, %s15
    %p43 = scmp.eq.s32.totalorder %s42, 0
    %s45 = sadd.s32 %s44, 1
    %s46 = scalar_select %p43, %s44, %s45
    %p49 = pneg %p43
    %p50 = scmp.eq.s32.totalorder %s8, 1
    %p51 = por %p49, %p50
    %p52 = scmp.ne.s32.totalorder %s44, %s47
    %p53 = scmp.eq.s32.totalorder %s8, 0
    %p54 = por %p52, %p53
    %p55 = scmp.ne.s32.totalorder %s44, %s47
    %p56 = scmp.eq.s32.totalorder %s13, 1
    %p57 = por %p55, %p56
    %p58 = scmp.ne.s32.totalorder %s47, %s48
    %p59 = scmp.eq.s32.totalorder %s13, 0
    %p60 = por %p58, %p59
    %p61 = scmp.ne.s32.totalorder %s47, %s48
    %p62 = scmp.eq.s32.totalorder %s14, 1
    %p63 = por %p61, %p62
    %p65 = scmp.ne.s32.totalorder %s48, %s64
    %p66 = scmp.eq.s32.totalorder %s14, 0
    %p67 = por %p65, %p66
    %s68 = ssub.s32 %s8, %s15
    %p69 = scmp.eq.s32.totalorder %s68, 0
    %s71 = sadd.s32 %s70, 1
    %s72 = scalar_select %p69, %s70, %s71
    %p75 = pneg %p69
    %p76 = scmp.eq.s32.totalorder %s8, 1
    %p77 = por %p75, %p76
    %p78 = scmp.ne.s32.totalorder %s70, %s73
    %p79 = scmp.eq.s32.totalorder %s8, 0
    %p80 = por %p78, %p79
    %p81 = scmp.ne.s32.totalorder %s70, %s73
    %p82 = scmp.eq.s32.totalorder %s13, 1
    %p83 = por %p81, %p82
    %p84 = scmp.ne.s32.totalorder %s73, %s74
    %p85 = scmp.eq.s32.totalorder %s13, 0
    %p86 = por %p84, %p85
    %p87 = scmp.ne.s32.totalorder %s73, %s74
    %p88 = scmp.eq.s32.totalorder %s14, 1
    %p89 = por %p87, %p88
    %p91 = scmp.ne.s32.totalorder %s74, %s90
    %p92 = scmp.eq.s32.totalorder %s14, 0
    %p93 = por %p91, %p92
    %p94 = scmp.le.s32.totalorder 1, %s8
    %p95 = scmp.lt.s32.totalorder %s8, 3
    %p96 = pnand %p94, %p95
    %p97 = pneg %p96
    // Predicated region
    $region9: #{triplet_loss.1} parent=5 // pred_check
      _
    $region10: #{triplet_loss.1} parent=5 // pred_check_branch
      %99 = sbr.rel (%p96) target = $region12
    $region11: #{triplet_loss.1} parent=5 // pred_region
      %s100 = ssub.s32 %s8, 1
    $region12: #{triplet_loss.1} parent=5 // pred_fallthru
      _
    %p101 = scmp.lt.s32.totalorder %s8, 2
    // Predicated region
    $region13: #{triplet_loss.1} parent=5 // pred_check
      %p102 = pneg %p101
    $region14: #{triplet_loss.1} parent=5 // pred_check_branch
      %104 = sbr.rel (%p102) target = $region16
    $region15: #{triplet_loss.1} parent=5 // pred_region
      // Predicated region
      $region17: #{triplet_loss.1} parent=15 // pred_check
        %p105 = pneg %p28
      $region18: #{triplet_loss.1} parent=15 // pred_check_branch
        %107 = sbr.rel (%p105) target = $region20
      $region19: #{triplet_loss.1} parent=15 // pred_region
        %s108 = smul.u32 2, %s8
        %p109 = scmp.lt.s32.totalorder %s108, 3
        %s110 = scalar_select %p109, %s108, 3
        %s111 = smul.addr %s110, 4
        %s112 = scalar_lea.vmem %s0, %s111
        %s113 = smul.u32 2, %s8
      $region20: #{triplet_loss.1} parent=15 // pred_fallthru
        _
      // Predicated region
      $region21: #{triplet_loss.1} parent=15 // pred_check
        %p114 = pneg %p54
      $region22: #{triplet_loss.1} parent=15 // pred_check_branch
        %116 = sbr.rel (%p114) target = $region24
      $region23: #{triplet_loss.1} parent=15 // pred_region
        %s117 = smul.u32 2, %s8
        %p118 = scmp.lt.s32.totalorder %s117, 3
        %s119 = scalar_select %p118, %s117, 3
        %s120 = smul.addr %s119, 3
        %s121 = smul.addr %s120, 4
        %s122 = scalar_lea.vmem %s1, %s121
        %s123 = smul.u32 2, %s8
      $region24: #{triplet_loss.1} parent=15 // pred_fallthru
        _
    $region16: #{triplet_loss.1} parent=5 // pred_fallthru
      _
    %p124 = scmp.le.s32.totalorder 1, %s8
    %p125 = scmp.lt.s32.totalorder %s8, 3
    %p126 = pnand %p124, %p125
    %p127 = pneg %p126
    // Predicated region
    $region25: #{triplet_loss.1} parent=5 // pred_check
      _
    $region26: #{triplet_loss.1} parent=5 // pred_check_branch
      %129 = sbr.rel (%p126) target = $region28
    $region27: #{triplet_loss.1} parent=5 // pred_region
      %s130 = ssub.s32 %s8, 1
      %s131 = smul.u32 2, %s13
      %p132 = scmp.lt.s32.totalorder %s131, 3
      %s133 = scalar_select %p132, %s131, 3
      %s134 = smul.addr %s133, 4
      %s135 = scalar_lea.vmem %s0, %s134
      %p136 = pneg %p34
      %p137 = pneg %p31
      %s138 = smul.u32 2, %s13
      %p139 = scmp.lt.s32.totalorder %s138, 3
      %s140 = scalar_select %p139, %s138, 3
      %s141 = smul.addr %s140, 3
      %s142 = smul.addr %s141, 4
      %s143 = scalar_lea.vmem %s1, %s142
      %p144 = pneg %p60
      %p145 = pneg %p57
      %p146 = pneg %p86
      %p147 = pneg %p83
      %s148 = smul.u32 2, %s13
      %p149 = scmp.lt.s32.totalorder %s148, 3
      %s150 = scalar_select %p149, %s148, 3
      %s151 = smul.addr %s150, 4
      %s152 = scalar_lea.vmem %s2, %s151
      %s153 = smul.u32 2, %s13
      %p154 = scmp.lt.s32.totalorder %s153, 3
      %s155 = scalar_select %p154, %s153, 3
      %s156 = smul.addr %s155, 4
      %s157 = scalar_lea.vmem %s0, %s156
      %s158 = smul.u32 2, %s13
      %s159 = smul.u32 2, %s13
      %p160 = scmp.lt.s32.totalorder %s159, 3
      %s161 = scalar_select %p160, %s159, 3
      %s162 = smul.addr %s161, 3
      %s163 = smul.addr %s162, 4
      %s164 = scalar_lea.vmem %s1, %s163
      %s165 = smul.u32 2, %s13
      %s166 = smul.u32 2, %s13
      %p167 = scmp.lt.s32.totalorder %s166, 3
      %s168 = scalar_select %p167, %s166, 3
      %s169 = smul.addr %s168, 4
      %s170 = scalar_lea.vmem %s2, %s169
      %s171 = smul.u32 2, %s13
      %v173 = vlaneseq
      %v174 = vshrl.u32 %v173, 7
      %v175 = vadd.s32 %v174, 8
      %v176 = vadd.s32 %v174, 16
      %v177 = vld [vmem:[%s157] sm:$0xf]
      %v178 = vld [vmem:[%s164] sm:$0xf]
      %v179 = vld [vmem:[%s164 + $0x4] sm:$0xf]
      %v180 = vld [vmem:[%s164 + $0x8] sm:$0x1]
      %v184 = vunpack.c.l.b16 %v178
      %v185 = vunpack.c.l.b16 %v179
      %v186 = vunpack.c.l.b16 %v180
      %v187 = vpack.c.b16 %v185, %v184
      %v188 = vpack.c.b16 %v186, %v186
      %191 = vmatprep.subr.bf16.mxu0 0
      %192 = vmatpush1.bf16.xpose.msra.mxu0 %v177
      %193 = vmatprep.subr.bf16.mxu0 0
      %194 = vmatpush1.bf16.xpose.msra.mxu0 0
      %195 = vmatprep.subr.bf16.mxu0 0
      %196 = vmatpush1.bf16.xpose.msra.mxu0 0
      %197 = vmatprep.subr.bf16.mxu0 0
      %198 = vmatpush1.bf16.xpose.msra.mxu0 0
      %199 = vmatprep.subr.bf16.mxu0 0
      %200 = vmatpush1.bf16.xpose.msra.mxu0 0
      %201 = vmatprep.subr.bf16.mxu0 0
      %202 = vmatpush1.bf16.xpose.msra.mxu0 0
      %203 = vmatprep.subr.bf16.mxu0 0
      %204 = vmatpush1.bf16.xpose.msra.mxu0 0
      %205 = vmatprep.subr.bf16.mxu0 0
      %206 = vmatpush1.bf16.xpose.msra.mxu0 0
      %207 = vmatprep.subr.bf16.mxu0 0
      %208 = vmatpush1.bf16.xpose.msra.mxu0 0
      %209 = vmatprep.subr.bf16.mxu0 0
      %210 = vmatpush1.bf16.xpose.msra.mxu0 0
      %211 = vmatprep.subr.bf16.mxu0 0
      %212 = vmatpush1.bf16.xpose.msra.mxu0 0
      %213 = vmatprep.subr.bf16.mxu0 0
      %214 = vmatpush1.bf16.xpose.msra.mxu0 0
      %215 = vmatprep.subr.bf16.mxu0 0
      %216 = vmatpush1.bf16.xpose.msra.mxu0 0
      %217 = vmatprep.subr.bf16.mxu0 0
      %218 = vmatpush1.bf16.xpose.msra.mxu0 0
      %219 = vmatprep.subr.bf16.mxu0 0
      %220 = vmatpush1.bf16.xpose.msra.mxu0 0
      %221 = vmatprep.subr.bf16.mxu0 0
      %222 = vmatpush1.bf16.xpose.msra.mxu0 0
      %223 = vmatprep.mubr.bf16.mxu0 0
      %224 = vmatmul.mubr.bf16.gmra.mrb[0].mxu0 %v187
      %v225 = vpop.f32.mrb[0].mxu0
      %v226 = vadd.f32 0.0, %v225
      %v227 = vpop.f32.mrb[0].mxu0
      %v228 = vpop.f32.mrb[0].mxu0
      %v229 = vadd.f32 0.0, %v228
      %v230 = vpop.f32.mrb[0].mxu0
      %231 = vmatprep.mubr.bf16.mxu0 0
      %232 = vmatmul.mubr.bf16.gmra.mrb[0].mxu0 %v188
      %v233 = vpop.f32.mrb[0].mxu0
      %v234 = vadd.f32 0.0, %v233
      %v235 = vpop.f32.mrb[0].mxu0
      %v236 = vpop.f32.mrb[0].mxu0
      %v237 = vpop.f32.mrb[0].mxu0
      %238 = vdwg.mxu0
      %v239 = vunpack.c.l.bf16 %v177
      %v240 = vunpack.c.l.bf16 %v178
      %v241 = vunpack.c.l.bf16 %v179
      %v242 = vunpack.c.l.bf16 %v180
      %v243 = vmul.f32 %v239, %v239
      %244 = vadd.xlane.f32.xlu0 %v243
      %v245 = vpop.xlane.xlu0 %244
      %v246 = vmul.f32 %v240, %v240
      %v247 = vmul.f32 %v241, %v241
      %v248 = vmul.f32 %v242, %v242
      %249 = vadd.xlane.f32.xlu0 %v246
      %v250 = vpop.xlane.xlu0 %249
      %251 = vadd.xlane.f32.xlu0 %v247
      %v252 = vpop.xlane.xlu0 %251
      %vm253 = vcmask 1041408
      %v254 = vsel %vm253, %v248, 0.0
      %255 = vadd.xlane.f32.xlu0 %v254
      %v256 = vpop.xlane.xlu0 %255
      %v258 = vlaneseq
      %v259 = vand.u32 %v258, 127
      %v260 = vlaneseq
      %v261 = vshrl.u32 %v260, 7
      %v262 = vsub.s32 %v259, %v261
      %v263 = vrot.slane %v245, %v262
      %vm264 = vcmask 1042434
      %v265 = vsel %vm264, %v263, %v263
      %vm266 = vcmask 1043459
      %v267 = vsel %vm266, %v263, %v265
      %vm268 = vcmask 1044484
      %v269 = vsel %vm268, %v263, %v267
      %vm270 = vcmask 1045509
      %v271 = vsel %vm270, %v263, %v269
      %vm272 = vcmask 1046534
      %v273 = vsel %vm272, %v263, %v271
      %vm274 = vcmask 1047559
      %v275 = vsel %vm274, %v263, %v273
      %v278 = vmul.f32 %v250, %v275
      %v279 = vmul.f32 %v252, %v275
      %v280 = vmul.f32 %v256, %v263
      %v281 = vmax.f32 %v278, 1e-16
      %v282 = vmax.f32 %v279, 1e-16
      %v283 = vmax.f32 %v280, 1e-16
      %v284 = vrsqrt.pop %v281
      %v285 = vrsqrt.pop %v282
      %v286 = vrsqrt.pop %v283
      %v287 = vmul.f32 %v226, %v284
      %v288 = vmul.f32 %v229, %v285
      %v289 = vmul.f32 %v234, %v286
      %v290 = vsub.f32 1.0, %v287
      %v291 = vsub.f32 1.0, %v288
      %v292 = vsub.f32 1.0, %v289
      %vm293 = vcmp.lt.s32.totalorder %v174, 6
      %vm294 = vcmp.lt.s32.totalorder %v175, 6
      %vm295 = vcmp.lt.s32.totalorder %v176, 6
      %v296 = vsel %vm293, 1, 0
      %v297 = vsel %vm294, 1, 0
      %v298 = vsel %vm295, 1, 0
      %vm299 = vcmp.eq.s32.totalorder %v296, 1
      %vm300 = vcmp.eq.s32.totalorder %v297, 1
      %vm301 = vcmp.eq.s32.totalorder %v298, 1
      %v302 = vsel %vm299, %v290, inf
      %v303 = vsel %vm300, %v291, inf
      %v304 = vsel %vm301, %v292, inf
      %vm305 = vcmask 64512
      %v306 = vsel %vm305, %v302, inf
      %v307 = vsel %vm305, %v303, inf
      %vm308 = vcmask 58368
      %v309 = vsel %vm308, %v304, inf
      %v310 = vmin.f32 %v306, %v307
      %v311 = vmin.f32 %v310, %v309
      %v312 = vrot.slane %v311, 4
      %v313 = vmin.f32 %v311, %v312
      %v314 = vrot.slane %v313, 2
      %v315 = vmin.f32 %v313, %v314
      %v316 = vrot.slane %v315, 1
      %v317 = vmin.f32 %v315, %v316
      %vm318 = vcmp.ge.s32.totalorder %v174, 6
      %vm319 = vcmp.ge.s32.totalorder %v175, 6
      %vm320 = vcmp.ge.s32.totalorder %v176, 6
      %vm321 = vcmp.lt.s32.totalorder %v174, 11
      %vm322 = vcmp.lt.s32.totalorder %v175, 11
      %vm323 = vcmp.lt.s32.totalorder %v176, 11
      %vm324 = vmand %vm318, %vm321
      %vm325 = vmand %vm319, %vm322
      %vm326 = vmand %vm320, %vm323
      %v327 = vsel %vm324, 1, 0
      %v328 = vsel %vm325, 1, 0
      %v329 = vsel %vm326, 1, 0
      %vm330 = vcmp.eq.s32.totalorder %v327, 1
      %vm331 = vcmp.eq.s32.totalorder %v328, 1
      %vm332 = vcmp.eq.s32.totalorder %v329, 1
      %v333 = vsel %vm330, %v290, inf
      %v334 = vsel %vm331, %v291, inf
      %v335 = vsel %vm332, %v292, inf
      %v336 = vsel %vm305, %v333, inf
      %v337 = vsel %vm305, %v334, inf
      %v338 = vsel %vm308, %v335, inf
      %v339 = vmin.f32 %v336, %v337
      %v340 = vmin.f32 %v339, %v338
      %v341 = vrot.slane %v340, 4
      %v342 = vmin.f32 %v340, %v341
      %v343 = vrot.slane %v342, 2
      %v344 = vmin.f32 %v342, %v343
      %v345 = vrot.slane %v344, 1
      %v346 = vmin.f32 %v344, %v345
      %vm347 = vcmp.ge.s32.totalorder %v174, 11
      %vm348 = vcmp.ge.s32.totalorder %v175, 11
      %vm349 = vcmp.ge.s32.totalorder %v176, 11
      %v350 = vsel %vm347, 1, 0
      %v351 = vsel %vm348, 1, 0
      %v352 = vsel %vm349, 1, 0
      %vm353 = vcmp.eq.s32.totalorder %v350, 1
      %vm354 = vcmp.eq.s32.totalorder %v351, 1
      %vm355 = vcmp.eq.s32.totalorder %v352, 1
      %v356 = vsel %vm353, %v290, inf
      %v357 = vsel %vm354, %v291, inf
      %v358 = vsel %vm355, %v292, inf
      %v359 = vsel %vm305, %v356, inf
      %v360 = vsel %vm305, %v357, inf
      %v361 = vsel %vm308, %v358, inf
      %v362 = vmin.f32 %v359, %v360
      %v363 = vmin.f32 %v362, %v361
      %v364 = vrot.slane %v363, 4
      %v365 = vmin.f32 %v363, %v364
      %v366 = vrot.slane %v365, 2
      %v367 = vmin.f32 %v365, %v366
      %v368 = vrot.slane %v367, 1
      %v369 = vmin.f32 %v367, %v368
      %v370 = vadd.f32 %v317, %v346
      %v371 = vmul.f32 %v370, 0.5
      %v372 = vsub.f32 %v371, %v369
      %v373 = vadd.f32 %v372, 0.5
      %v374 = vmax.f32 %v373, 0.0
      %vm375 = vcmask 1040384
      %v376 = vsel %vm375, %v374, %v369
      %v377 = vsel %vm253, %v376, %v317
      %vm378 = vcmask 59392
      %379 = vst.msk [vmem:[%s170] sm:$0x7] %vm378, %v377
      %s380 = scalar_lea.vmem %s157, 4
      %v381 = vld [vmem:[%s380] sm:$0xf]
      %s382 = scalar_lea.vmem %s164, 12
      %v383 = vld [vmem:[%s382] sm:$0xf]
      %v384 = vld [vmem:[%s382 + $0x4] sm:$0xf]
      %v385 = vld [vmem:[%s382 + $0x8] sm:$0x1]
      %v389 = vunpack.c.l.b16 %v383
      %v390 = vunpack.c.l.b16 %v384
      %v391 = vunpack.c.l.b16 %v385
      %v392 = vpack.c.b16 %v390, %v389
      %v393 = vpack.c.b16 %v391, %v391
      %396 = vmatprep.subr.bf16.mxu0 0
      %397 = vmatpush1.bf16.xpose.msra.mxu0 %v381
      %398 = vmatprep.subr.bf16.mxu0 0
      %399 = vmatpush1.bf16.xpose.msra.mxu0 0
      %400 = vmatprep.subr.bf16.mxu0 0
      %401 = vmatpush1.bf16.xpose.msra.mxu0 0
      %402 = vmatprep.subr.bf16.mxu0 0
      %403 = vmatpush1.bf16.xpose.msra.mxu0 0
      %404 = vmatprep.subr.bf16.mxu0 0
      %405 = vmatpush1.bf16.xpose.msra.mxu0 0
      %406 = vmatprep.subr.bf16.mxu0 0
      %407 = vmatpush1.bf16.xpose.msra.mxu0 0
      %408 = vmatprep.subr.bf16.mxu0 0
      %409 = vmatpush1.bf16.xpose.msra.mxu0 0
      %410 = vmatprep.subr.bf16.mxu0 0
      %411 = vmatpush1.bf16.xpose.msra.mxu0 0
      %412 = vmatprep.subr.bf16.mxu0 0
      %413 = vmatpush1.bf16.xpose.msra.mxu0 0
      %414 = vmatprep.subr.bf16.mxu0 0
      %415 = vmatpush1.bf16.xpose.msra.mxu0 0
      %416 = vmatprep.subr.bf16.mxu0 0
      %417 = vmatpush1.bf16.xpose.msra.mxu0 0
      %418 = vmatprep.subr.bf16.mxu0 0
      %419 = vmatpush1.bf16.xpose.msra.mxu0 0
      %420 = vmatprep.subr.bf16.mxu0 0
      %421 = vmatpush1.bf16.xpose.msra.mxu0 0
      %422 = vmatprep.subr.bf16.mxu0 0
      %423 = vmatpush1.bf16.xpose.msra.mxu0 0
      %424 = vmatprep.subr.bf16.mxu0 0
      %425 = vmatpush1.bf16.xpose.msra.mxu0 0
      %426 = vmatprep.subr.bf16.mxu0 0
      %427 = vmatpush1.bf16.xpose.msra.mxu0 0
      %428 = vmatprep.mubr.bf16.mxu0 0
      %429 = vmatmul.mubr.bf16.gmra.mrb[0].mxu0 %v392
      %v430 = vpop.f32.mrb[0].mxu0
      %v431 = vadd.f32 0.0, %v430
      %v432 = vpop.f32.mrb[0].mxu0
      %v433 = vpop.f32.mrb[0].mxu0
      %v434 = vadd.f32 0.0, %v433
      %v435 = vpop.f32.mrb[0].mxu0
      %436 = vmatprep.mubr.bf16.mxu0 0
      %437 = vmatmul.mubr.bf16.gmra.mrb[0].mxu0 %v393
      %v438 = vpop.f32.mrb[0].mxu0
      %v439 = vadd.f32 0.0, %v438
      %v440 = vpop.f32.mrb[0].mxu0
      %v441 = vpop.f32.mrb[0].mxu0
      %v442 = vpop.f32.mrb[0].mxu0
      %443 = vdwg.mxu0
      %v444 = vunpack.c.l.bf16 %v381
      %v445 = vunpack.c.l.bf16 %v383
      %v446 = vunpack.c.l.bf16 %v384
      %v447 = vunpack.c.l.bf16 %v385
      %v448 = vmul.f32 %v444, %v444
      %449 = vadd.xlane.f32.xlu0 %v448
      %v450 = vpop.xlane.xlu0 %449
      %v451 = vmul.f32 %v445, %v445
      %v452 = vmul.f32 %v446, %v446
      %v453 = vmul.f32 %v447, %v447
      %454 = vadd.xlane.f32.xlu0 %v451
      %v455 = vpop.xlane.xlu0 %454
      %456 = vadd.xlane.f32.xlu0 %v452
      %v457 = vpop.xlane.xlu0 %456
      %v458 = vsel %vm253, %v453, 0.0
      %459 = vadd.xlane.f32.xlu0 %v458
      %v460 = vpop.xlane.xlu0 %459
      %v462 = vlaneseq
      %v463 = vshrl.u32 %v462, 7
      %v464 = vsub.s32 %v259, %v463
      %v465 = vrot.slane %v450, %v464
      %v466 = vsel %vm264, %v465, %v465
      %v467 = vsel %vm266, %v465, %v466
      %v468 = vsel %vm268, %v465, %v467
      %v469 = vsel %vm270, %v465, %v468
      %v470 = vsel %vm272, %v465, %v469
      %v471 = vsel %vm274, %v465, %v470
      %v474 = vmul.f32 %v455, %v471
      %v475 = vmul.f32 %v457, %v471
      %v476 = vmul.f32 %v460, %v465
      %v477 = vmax.f32 %v474, 1e-16
      %v478 = vmax.f32 %v475, 1e-16
      %v479 = vmax.f32 %v476, 1e-16
      %v480 = vrsqrt.pop %v477
      %v481 = vrsqrt.pop %v478
      %v482 = vrsqrt.pop %v479
      %v483 = vmul.f32 %v431, %v480
      %v484 = vmul.f32 %v434, %v481
      %v485 = vmul.f32 %v439, %v482
      %v486 = vsub.f32 1.0, %v483
      %v487 = vsub.f32 1.0, %v484
      %v488 = vsub.f32 1.0, %v485
      %v489 = vsel %vm299, %v486, inf
      %v490 = vsel %vm300, %v487, inf
      %v491 = vsel %vm301, %v488, inf
      %v492 = vsel %vm305, %v489, inf
      %v493 = vsel %vm305, %v490, inf
      %v494 = vsel %vm308, %v491, inf
      %v495 = vmin.f32 %v492, %v493
      %v496 = vmin.f32 %v495, %v494
      %v497 = vrot.slane %v496, 4
      %v498 = vmin.f32 %v496, %v497
      %v499 = vrot.slane %v498, 2
      %v500 = vmin.f32 %v498, %v499
      %v501 = vrot.slane %v500, 1
      %v502 = vmin.f32 %v500, %v501
      %v503 = vsel %vm330, %v486, inf
      %v504 = vsel %vm331, %v487, inf
      %v505 = vsel %vm332, %v488, inf
      %v506 = vsel %vm305, %v503, inf
      %v507 = vsel %vm305, %v504, inf
      %v508 = vsel %vm308, %v505, inf
      %v509 = vmin.f32 %v506, %v507
      %v510 = vmin.f32 %v509, %v508
      %v511 = vrot.slane %v510, 4
      %v512 = vmin.f32 %v510, %v511
      %v513 = vrot.slane %v512, 2
      %v514 = vmin.f32 %v512, %v513
      %v515 = vrot.slane %v514, 1
      %v516 = vmin.f32 %v514, %v515
      %v517 = vsel %vm353, %v486, inf
      %v518 = vsel %vm354, %v487, inf
      %v519 = vsel %vm355, %v488, inf
      %v520 = vsel %vm305, %v517, inf
      %v521 = vsel %vm305, %v518, inf
      %v522 = vsel %vm308, %v519, inf
      %v523 = vmin.f32 %v520, %v521
      %v524 = vmin.f32 %v523, %v522
      %v525 = vrot.slane %v524, 4
      %v526 = vmin.f32 %v524, %v525
      %v527 = vrot.slane %v526, 2
      %v528 = vmin.f32 %v526, %v527
      %v529 = vrot.slane %v528, 1
      %v530 = vmin.f32 %v528, %v529
      %v531 = vadd.f32 %v502, %v516
      %v532 = vmul.f32 %v531, 0.5
      %v533 = vsub.f32 %v532, %v530
      %v534 = vadd.f32 %v533, 0.5
      %v535 = vmax.f32 %v534, 0.0
      %v536 = vsel %vm375, %v535, %v530
      %v537 = vsel %vm253, %v536, %v502
      %s538 = scalar_lea.vmem %s170, 4
      %539 = vst.msk [vmem:[%s538] sm:$0x7] %vm378, %v537
      %s540 = smul.u32 2, %s13
      %p541 = scmp.lt.s32.totalorder %s540, 3
      %s542 = scalar_select %p541, %s540, 3
      %s543 = smul.addr %s542, 4
      %s544 = scalar_lea.vmem %s2, %s543
      // Predicated region
      $region29: #{triplet_loss.1} parent=27 // pred_check
        %p545 = pneg %p83
      $region30: #{triplet_loss.1} parent=27 // pred_check_branch
        %547 = sbr.rel (%p545) target = $region32
      $region31: #{triplet_loss.1} parent=27 // pred_region
        %s548 = smul.u32 2, %s13
      $region32: #{triplet_loss.1} parent=27 // pred_fallthru
        _
    $region28: #{triplet_loss.1} parent=5 // pred_fallthru
      _
    %p549 = scmp.le.s32.totalorder 2, %s8
    // Predicated region
    $region33: #{triplet_loss.1} parent=5 // pred_check
      %p550 = pneg %p549
    $region34: #{triplet_loss.1} parent=5 // pred_check_branch
      %552 = sbr.rel (%p550) target = $region36
    $region35: #{triplet_loss.1} parent=5 // pred_region
      %s553 = ssub.s32 %s8, 2
      // Predicated region
      $region37: #{triplet_loss.1} parent=35 // pred_check
        %p554 = pneg %p89
      $region38: #{triplet_loss.1} parent=35 // pred_check_branch
        %556 = sbr.rel (%p554) target = $region40
      $region39: #{triplet_loss.1} parent=35 // pred_region
        %s557 = smul.u32 2, %s14
        %p558 = scmp.lt.s32.totalorder %s557, 3
        %s559 = scalar_select %p558, %s557, 3
        %s560 = smul.addr %s559, 4
        %s561 = scalar_lea.vmem %s2, %s560
      $region40: #{triplet_loss.1} parent=35 // pred_fallthru
        _
    $region36: #{triplet_loss.1} parent=5 // pred_fallthru
      _
  $region6: #{triplet_loss.1} parent=0 // loop_footer
    %s12 = sadd.s32 1, %s8
  $region7: #{triplet_loss.1} parent=0 // loop_footer_branch
    %7 = sbr.rel target = $region3
  $region8: #{triplet_loss.1} parent=0 // loop_exit
    _

</llo_original>
